<compile_context>
chip_gen: v7x
topology: tpu7x:2x2x1
jax: 0.10.0
libtpu: 0.0.40
codegen_flags: <defaults>
</compile_context>

<pallas_src>
import jax
import jax.numpy as jnp
from jax import lax
from jax.experimental import pallas as pl
from jax.experimental.pallas import tpu as pltpu


def _round_up(n, m):
    return ((n + m - 1) // m) * m


def _pick_lane_chunk(tm):
    # tm is always a multiple of 128; keep per-chunk intermediates <= (32, 512) f32.
    for c in (512, 256, 128):
        if tm % c == 0:
            return c
    return 128


def _make_kernel(input_dim, hidden_dim, output_dim, lane_chunk, n_chunks):
    h, o = hidden_dim, output_dim
    bias_col = max(input_dim, h)  # biases live in the last slab column

    def kernel(x_ref, w_ref, o_ref):
        # x_ref: (TM, input_dim)              -- natural layout, no wrapper transpose
        # w_ref: (2h+o, max(in,h)+1)          -- packed [w1; w2; w3 | b] slab, VMEM-resident
        # o_ref: (o, TM)                      -- batch on the lane axis (lane-dense stores)
        w1 = w_ref[0:h, 0:input_dim]                    # (h, in)
        w2 = w_ref[h:2 * h, 0:h]                        # (h, h)
        w3 = w_ref[2 * h:2 * h + o, 0:h]                # (o, h)
        b1 = w_ref[0:h, bias_col:bias_col + 1]          # (h, 1) -> broadcast over lanes
        b2 = w_ref[h:2 * h, bias_col:bias_col + 1]
        b3 = w_ref[2 * h:2 * h + o, bias_col:bias_col + 1]

        def body(c, carry):
            off = pl.multiple_of(c * lane_chunk, lane_chunk)
            xt = x_ref[pl.ds(off, lane_chunk), :]       # (chunk, in)
            # (h, in) x (chunk, in) contracted over the feature axis -> (h, chunk)
            h1 = jnp.maximum(
                lax.dot_general(w1, xt, (((1,), (1,)), ((), ())),
                                preferred_element_type=jnp.float32) + b1, 0.0)
            h2 = jnp.maximum(
                jnp.dot(w2, h1, preferred_element_type=jnp.float32) + b2, 0.0)
            out = jnp.dot(w3, h2, preferred_element_type=jnp.float32) + b3
            o_ref[:, pl.ds(off, lane_chunk)] = out.astype(o_ref.dtype)
            return carry

        lax.fori_loop(0, n_chunks, body, 0, unroll=True)

    return kernel


def pack_params(params, input_dim, hidden_dim, output_dim):
    """Pack six nn.Linear params (W=(out,in), b=(out,)) into one slab; biases in last col."""
    w1, b1, w2, b2, w3, b3 = params
    h, o = hidden_dim, output_dim
    rows = 2 * h + o
    cols = max(input_dim, h)
    slab = jnp.zeros((rows, cols + 1), jnp.float32)
    slab = slab.at[0:h, 0:input_dim].set(w1.astype(jnp.float32))
    slab = slab.at[h:2 * h, 0:h].set(w2.astype(jnp.float32))
    slab = slab.at[2 * h:rows, 0:h].set(w3.astype(jnp.float32))
    bias = jnp.concatenate(
        [b1.reshape(h), b2.reshape(h), b3.reshape(o)]).astype(jnp.float32)
    slab = slab.at[:, cols].set(bias)
    return slab


def reference_forward(x, params):
    w1, b1, w2, b2, w3, b3 = params
    h1 = jnp.maximum(x @ w1.T + b1, 0.0)
    h2 = jnp.maximum(h1 @ w2.T + b2, 0.0)
    return h2 @ w3.T + b3


def cls_network_forward(x, params, block_batch=4096, xla_fallback_batch=0):
    """Forward pass equivalent to the PyTorch cls_network. x: (B, input_dim)."""
    w1, _, _, _, w3, _ = params
    B, input_dim = x.shape
    hidden_dim = w1.shape[0]
    output_dim = w3.shape[0]

    # Tiny batches are dominated by launch/padding overhead; production code
    # would set xla_fallback_batch ~256.  Default 0 so the Pallas path is used here.
    if B <= xla_fallback_batch:
        return reference_forward(jnp.asarray(x, jnp.float32), params)

    w_slab = pack_params(params, input_dim, hidden_dim, output_dim)

    # --- batch tiling: lane axis = batch, tile multiple of 128 ---------------
    block_batch = max(128, _round_up(int(block_batch), 128))
    b128 = _round_up(B, 128)              # minimal lane padding
    n_units = b128 // 128
    units = min(block_batch // 128, n_units)
    if n_units >= 2:                      # guarantee >=2 grid steps (v7x dual-TC)
        units = min(units, max(1, n_units // 2))
    tm = units * 128
    grid_n = pl.cdiv(b128, tm)
    padded_b = grid_n * tm

    x = jnp.asarray(x, jnp.float32)
    if padded_b != B:
        x = jnp.pad(x, ((0, padded_b - B), (0, 0)))

    lane_chunk = _pick_lane_chunk(tm)
    n_chunks = tm // lane_chunk

    flops = 2 * padded_b * (input_dim * hidden_dim
                            + hidden_dim * hidden_dim
                            + hidden_dim * output_dim)
    bytes_accessed = 4 * (padded_b * input_dim + output_dim * padded_b + int(w_slab.size))

    out_t = pl.pallas_call(
        _make_kernel(input_dim, hidden_dim, output_dim, lane_chunk, n_chunks),
        out_shape=jax.ShapeDtypeStruct((output_dim, padded_b), jnp.float32),
        grid=(grid_n,),
        in_specs=[
            pl.BlockSpec((tm, input_dim), lambda i: (i, 0)),   # x tile, natural layout, pipelined
            pl.BlockSpec(w_slab.shape, lambda i: (0, 0)),      # weight+bias slab, VMEM-resident
        ],
        out_specs=pl.BlockSpec((output_dim, tm), lambda i: (0, i)),
        compiler_params=pltpu.CompilerParams(dimension_semantics=("parallel",)),
        cost_estimate=pl.CostEstimate(flops=flops, transcendentals=0,
                                      bytes_accessed=bytes_accessed),
    )(x, w_slab)

    return out_t[:, :B].T                                      # (B, output_dim)


def init_params(key, input_dim, hidden_dim=32, output_dim=2):
    """PyTorch nn.Linear default init: W=(out,in), b=(out,), uniform(+-1/sqrt(fan_in))."""
    def linear(k, fan_in, fan_out):
        kw, kb = jax.random.split(k)
        bound = 1.0 / jnp.sqrt(fan_in)
        w = jax.random.uniform(kw, (fan_out, fan_in), jnp.float32, -bound, bound)
        b = jax.random.uniform(kb, (fan_out,), jnp.float32, -bound, bound)
        return w, b

    k1, k2, k3 = jax.random.split(key, 3)
    w1, b1 = linear(k1, input_dim, hidden_dim)
    w2, b2 = linear(k2, hidden_dim, hidden_dim)
    w3, b3 = linear(k3, hidden_dim, output_dim)
    return w1, b1, w2, b2, w3, b3


if __name__ == "__main__":
    key = jax.random.PRNGKey(0)
    k_x, k_p, k_x2 = jax.random.split(key, 3)

    batch, input_dim, hidden_dim, output_dim = 8, 16, 32, 2
    x = jax.random.normal(k_x, (batch, input_dim), jnp.float32)
    params = init_params(k_p, input_dim, hidden_dim, output_dim)

    out = jax.block_until_ready(cls_network_forward(x, params))
    ref = reference_forward(x, params)
    assert out.shape == (batch, output_dim)
    assert jnp.allclose(out, ref, atol=1e-4, rtol=1e-4)

    # Second check: non-multiple batch, >=2 grid steps (exercises padding,
    # pipelined x tiles, VMEM-resident slab across steps, in-kernel chunk loop).
    x2 = jax.random.normal(k_x2, (200, input_dim), jnp.float32)
    out2 = jax.block_until_ready(cls_network_forward(x2, params))
    ref2 = reference_forward(x2, params)
    assert out2.shape == (200, output_dim)
    assert jnp.allclose(out2, ref2, atol=1e-4, rtol=1e-4)

    print("KERNEL_OK")
</pallas_src>

<mosaic_0001>
module attributes {stable_mosaic.version = 11 : i64} {
  func.func @kernel(%arg0: i32, %arg1: memref<128x16xf32, #tpu.memory_space<vmem>>, %arg2: memref<66x33xf32, #tpu.memory_space<vmem>>, %arg3: memref<2x128xf32, #tpu.memory_space<vmem>>) attributes {dimension_semantics = [#tpu.dimension_semantics<parallel>], iteration_bounds = array<i64: 1>, scalar_prefetch = 0 : i64, scratch_operands = 0 : i64, tpu.core_type = #tpu.core_type<tc>, window_params = [{transform_indices = @transform_0, window_bounds = array<i64: 128, 16>}, {pipeline_mode = #tpu.pipeline_mode<synchronous>, transform_indices = @transform_1, window_bounds = array<i64: 66, 33>}, {transform_indices = @transform_2, window_bounds = array<i64: 2, 128>}]} {
    %c0 = arith.constant 0 : index
    %c0_0 = arith.constant 0 : index
    %0 = vector.load %arg2[%c0, %c0_0] : memref<66x33xf32, #tpu.memory_space<vmem>>, vector<32x16xf32>
    %c32 = arith.constant 32 : index
    %c0_1 = arith.constant 0 : index
    %1 = vector.load %arg2[%c32, %c0_1] : memref<66x33xf32, #tpu.memory_space<vmem>>, vector<32x32xf32>
    %c64 = arith.constant 64 : index
    %c0_2 = arith.constant 0 : index
    %2 = vector.load %arg2[%c64, %c0_2] : memref<66x33xf32, #tpu.memory_space<vmem>>, vector<2x32xf32>
    %c0_3 = arith.constant 0 : index
    %c32_4 = arith.constant 32 : index
    %3 = vector.load %arg2[%c0_3, %c32_4] : memref<66x33xf32, #tpu.memory_space<vmem>>, vector<32x1xf32>
    %c32_5 = arith.constant 32 : index
    %c32_6 = arith.constant 32 : index
    %4 = vector.load %arg2[%c32_5, %c32_6] : memref<66x33xf32, #tpu.memory_space<vmem>>, vector<32x1xf32>
    %c64_7 = arith.constant 64 : index
    %c32_8 = arith.constant 32 : index
    %5 = vector.load %arg2[%c64_7, %c32_8] : memref<66x33xf32, #tpu.memory_space<vmem>>, vector<2x1xf32>
    %c0_i32 = arith.constant 0 : i32
    %c128_i32 = arith.constant 128 : i32
    %6 = arith.muli %c0_i32, %c128_i32 : i32
    %7 = tpu.assume_multiple %6, 128 : i32
    %8 = arith.index_cast %7 : i32 to index
    %c0_9 = arith.constant 0 : index
    %9 = vector.load %arg1[%8, %c0_9] : memref<128x16xf32, #tpu.memory_space<vmem>>, vector<128x16xf32>
    %cst = arith.constant dense<0.000000e+00> : vector<32x128xf32>
    %10 = tpu.matmul %0, %9, %cst {dimension_numbers = #tpu.dot_dimension_numbers<[1], [1], [0], [0], [0, 0, 1, 0], [], []>} : vector<32x16xf32>, vector<128x16xf32>, vector<32x128xf32> -> vector<32x128xf32>
    %11 = vector.broadcast %3 : vector<32x1xf32> to vector<32x128xf32>
    %12 = arith.addf %10, %11 : vector<32x128xf32>
    %cst_10 = arith.constant 0.000000e+00 : f32
    %13 = vector.broadcast %cst_10 : f32 to vector<32x128xf32>
    %14 = arith.maximumf %12, %13 : vector<32x128xf32>
    %cst_11 = arith.constant dense<0.000000e+00> : vector<32x128xf32>
    %15 = tpu.matmul %1, %14, %cst_11 {dimension_numbers = #tpu.dot_dimension_numbers<[1], [0], [0], [1], [0, 0, 1, 1], [], []>} : vector<32x32xf32>, vector<32x128xf32>, vector<32x128xf32> -> vector<32x128xf32>
    %16 = vector.broadcast %4 : vector<32x1xf32> to vector<32x128xf32>
    %17 = arith.addf %15, %16 : vector<32x128xf32>
    %cst_12 = arith.constant 0.000000e+00 : f32
    %18 = vector.broadcast %cst_12 : f32 to vector<32x128xf32>
    %19 = arith.maximumf %17, %18 : vector<32x128xf32>
    %cst_13 = arith.constant dense<0.000000e+00> : vector<2x128xf32>
    %20 = tpu.matmul %2, %19, %cst_13 {dimension_numbers = #tpu.dot_dimension_numbers<[1], [0], [0], [1], [0, 0, 1, 1], [], []>} : vector<2x32xf32>, vector<32x128xf32>, vector<2x128xf32> -> vector<2x128xf32>
    %21 = vector.broadcast %5 : vector<2x1xf32> to vector<2x128xf32>
    %22 = arith.addf %20, %21 : vector<2x128xf32>
    %c0_14 = arith.constant 0 : index
    %23 = arith.index_cast %7 : i32 to index
    %24 = vector.load %arg3[%c0_14, %23] : memref<2x128xf32, #tpu.memory_space<vmem>>, vector<2x128xf32>
    tpu.vector_store %arg3[%c0_14, %23], %22 {strides = array<i32>} : memref<2x128xf32, #tpu.memory_space<vmem>>, vector<2x128xf32>,
    %c1_i32 = arith.constant 1 : i32
    return
  }
  func.func @transform_0(%arg0: i32) -> (i32, i32) {
    %c0_i32 = arith.constant 0 : i32
    %c0_i32_0 = arith.constant 0 : i32
    return %arg0, %c0_i32 : i32, i32
  }
  func.func @transform_1(%arg0: i32) -> (i32, i32) {
    %c0_i32 = arith.constant 0 : i32
    %c0_i32_0 = arith.constant 0 : i32
    %c0_i32_1 = arith.constant 0 : i32
    return %c0_i32, %c0_i32_0 : i32, i32
  }
  func.func @transform_2(%arg0: i32) -> (i32, i32) {
    %c0_i32 = arith.constant 0 : i32
    %c0_i32_0 = arith.constant 0 : i32
    return %c0_i32, %arg0 : i32, i32
  }
}

</mosaic_0001>

<llo_original>
// kernel: tpu_custom_call.1
$region0: #{tpu_custom_call.1}
  #allocation0 [shape = 'u32[]', space=smem, size = 0x4, offset = 0x4, fixed_abs, tag = 'smem constant byte address 0x4 - core index']
  #allocation1 [shape = 'u32[144,128]{1,0:T(1,128)}', space=vmem, size = 0x12000, scoped, tag = 'internal scratch']
  %s0 = inlined_call_operand.vmem [shape: f32[128,16], index: 0, kind: input, shape index: {}]
  %s1 = inlined_call_operand.vmem [shape: f32[66,33], index: 1, kind: input, shape index: {}]
  %s2 = inlined_call_operand.hbm [shape: f32[2,128], index: 2, kind: output, shape index: {}]
  %s3 = sld [smem:[#allocation0]]
  $region18: #{tpu_custom_call.1} parent=0
    _
  %s5 = ssub.s32 1, %s3
  %s6 = scalar_select 0, %s5, %s3
  $region1: #{tpu_custom_call.1} parent=0
    #allocation2 [shape = 'u8[1024]{0}', space=vmem, size = 0x400, scoped, tag = 'output window, operand 0, single buffered']
    #allocation3 [shape = 's32[1]{0}', space=sflag, size = 0x4, scoped, tag = 'scoped memory for tpu_custom_call.1']
    %7 = vsyncpa [#allocation3], 0
    // Predicated region
    $region2: #{tpu_custom_call.1} parent=1 // pred_check
      _
    $region3: #{tpu_custom_call.1} parent=1 // pred_check_branch
      %9 = sbr.rel (0) target = $region5
    $region4: #{tpu_custom_call.1} parent=1 // pred_region
      _
    $region5: #{tpu_custom_call.1} parent=1 // pred_fallthru
      _
    // Predicated region
    $region6: #{tpu_custom_call.1} parent=1 // pred_check
      _
    $region7: #{tpu_custom_call.1} parent=1 // pred_check_branch
      %11 = sbr.rel (0) target = $region9
    $region8: #{tpu_custom_call.1} parent=1 // pred_region
      _
    $region9: #{tpu_custom_call.1} parent=1 // pred_fallthru
      _
    %v12 = vld [vmem:[%s1] sm:$0xff]
    %v13 = vld [vmem:[%s1 + $0x8] sm:$0xff]
    %v14 = vld [vmem:[%s1 + $0x10] sm:$0xff]
    %v15 = vld [vmem:[%s1 + $0x18] sm:$0xff]
    %v16 = vld [vmem:[%s1 + $0x20] sm:$0xff]
    %v17 = vld [vmem:[%s1 + $0x28] sm:$0xff]
    %v18 = vld [vmem:[%s1 + $0x30] sm:$0xff]
    %v19 = vld [vmem:[%s1 + $0x38] sm:$0xff]
    %v20 = vld [vmem:[%s1 + $0x40] sm:$0x3]
    %v21 = vld [vmem:[%s0] sm:$0xff]
    %v22 = vld [vmem:[%s0 + $0x8] sm:$0xff]
    %v23 = vld [vmem:[%s0 + $0x10] sm:$0xff]
    %v24 = vld [vmem:[%s0 + $0x18] sm:$0xff]
    %v25 = vld [vmem:[%s0 + $0x20] sm:$0xff]
    %v26 = vld [vmem:[%s0 + $0x28] sm:$0xff]
    %v27 = vld [vmem:[%s0 + $0x30] sm:$0xff]
    %v28 = vld [vmem:[%s0 + $0x38] sm:$0xff]
    %v29 = vld [vmem:[%s0 + $0x40] sm:$0xff]
    %v30 = vld [vmem:[%s0 + $0x48] sm:$0xff]
    %v31 = vld [vmem:[%s0 + $0x50] sm:$0xff]
    %v32 = vld [vmem:[%s0 + $0x58] sm:$0xff]
    %v33 = vld [vmem:[%s0 + $0x60] sm:$0xff]
    %v34 = vld [vmem:[%s0 + $0x68] sm:$0xff]
    %v35 = vld [vmem:[%s0 + $0x70] sm:$0xff]
    %v36 = vld [vmem:[%s0 + $0x78] sm:$0xff]
    %38 = vset.pattern.permute.xlu0 32
    %39 = vperm.xlu0 %38, %v12
    %v40 = vpop.permute.xlu0 %39
    %43 = vset.pattern.permute.xlu0 32
    %44 = vperm.xlu0 %43, %v13
    %v45 = vpop.permute.xlu0 %44
    %48 = vset.pattern.permute.xlu0 32
    %49 = vperm.xlu0 %48, %v14
    %v50 = vpop.permute.xlu0 %49
    %53 = vset.pattern.permute.xlu0 32
    %54 = vperm.xlu0 %53, %v15
    %v55 = vpop.permute.xlu0 %54
    %vm57 = vcmask 130048
    %v58 = vsel %vm57, %v12, 0
    %v60 = vsel %vm57, %v13, 0
    %v62 = vsel %vm57, %v14, 0
    %v64 = vsel %vm57, %v15, 0
    %v67 = vsel %vm57, %v21, 0
    %v70 = vsel %vm57, %v22, 0
    %v73 = vsel %vm57, %v23, 0
    %v76 = vsel %vm57, %v24, 0
    %v79 = vsel %vm57, %v25, 0
    %v82 = vsel %vm57, %v26, 0
    %v85 = vsel %vm57, %v27, 0
    %v88 = vsel %vm57, %v28, 0
    %v91 = vsel %vm57, %v29, 0
    %v94 = vsel %vm57, %v30, 0
    %v97 = vsel %vm57, %v31, 0
    %v100 = vsel %vm57, %v32, 0
    %v103 = vsel %vm57, %v33, 0
    %v106 = vsel %vm57, %v34, 0
    %v109 = vsel %vm57, %v35, 0
    %v112 = vsel %vm57, %v36, 0
    %114 = vmatprep.subr.mxu0 0.0
    %115 = vmatpush1.xpose.msra.mxu0 %v67
    %116 = vmatprep.subr.mxu0 0.0
    %117 = vmatpush1.xpose.msra.mxu0 %v70
    %118 = vmatprep.subr.mxu0 0.0
    %119 = vmatpush1.xpose.msra.mxu0 %v73
    %120 = vmatprep.subr.mxu0 0.0
    %121 = vmatpush1.xpose.msra.mxu0 %v76
    %122 = vmatprep.subr.mxu0 0.0
    %123 = vmatpush1.xpose.msra.mxu0 %v79
    %124 = vmatprep.subr.mxu0 0.0
    %125 = vmatpush1.xpose.msra.mxu0 %v82
    %126 = vmatprep.subr.mxu0 0.0
    %127 = vmatpush1.xpose.msra.mxu0 %v85
    %128 = vmatprep.subr.mxu0 0.0
    %129 = vmatpush1.xpose.msra.mxu0 %v88
    %130 = vmatprep.subr.mxu0 0.0
    %131 = vmatpush1.xpose.msra.mxu0 %v91
    %132 = vmatprep.subr.mxu0 0.0
    %133 = vmatpush1.xpose.msra.mxu0 %v94
    %134 = vmatprep.subr.mxu0 0.0
    %135 = vmatpush1.xpose.msra.mxu0 %v97
    %136 = vmatprep.subr.mxu0 0.0
    %137 = vmatpush1.xpose.msra.mxu0 %v100
    %138 = vmatprep.subr.mxu0 0.0
    %139 = vmatpush1.xpose.msra.mxu0 %v103
    %140 = vmatprep.subr.mxu0 0.0
    %141 = vmatpush1.xpose.msra.mxu0 %v106
    %142 = vmatprep.subr.mxu0 0.0
    %143 = vmatpush1.xpose.msra.mxu0 %v109
    %144 = vmatprep.subr.mxu0 0.0
    %145 = vmatpush1.xpose.msra.mxu0 %v112
    %146 = vmatprep.subr.mxu0 0.0
    %147 = vmatpush1.xpose.msra.mxu0 0.0
    %148 = vmatprep.subr.mxu0 0.0
    %149 = vmatpush1.xpose.msra.mxu0 0.0
    %150 = vmatprep.subr.mxu0 0.0
    %151 = vmatpush1.xpose.msra.mxu0 0.0
    %152 = vmatprep.subr.mxu0 0.0
    %153 = vmatpush1.xpose.msra.mxu0 0.0
    %154 = vmatprep.subr.mxu0 0.0
    %155 = vmatpush1.xpose.msra.mxu0 0.0
    %156 = vmatprep.subr.mxu0 0.0
    %157 = vmatpush1.xpose.msra.mxu0 0.0
    %158 = vmatprep.subr.mxu0 0.0
    %159 = vmatpush1.xpose.msra.mxu0 0.0
    %160 = vmatprep.subr.mxu0 0.0
    %161 = vmatpush1.xpose.msra.mxu0 0.0
    %162 = vmatprep.subr.mxu0 0.0
    %163 = vmatpush1.xpose.msra.mxu0 0.0
    %164 = vmatprep.subr.mxu0 0.0
    %165 = vmatpush1.xpose.msra.mxu0 0.0
    %166 = vmatprep.subr.mxu0 0.0
    %167 = vmatpush1.xpose.msra.mxu0 0.0
    %168 = vmatprep.subr.mxu0 0.0
    %169 = vmatpush1.xpose.msra.mxu0 0.0
    %170 = vmatprep.subr.mxu0 0.0
    %171 = vmatpush1.xpose.msra.mxu0 0.0
    %172 = vmatprep.subr.mxu0 0.0
    %173 = vmatpush1.xpose.msra.mxu0 0.0
    %174 = vmatprep.subr.mxu0 0.0
    %175 = vmatpush1.xpose.msra.mxu0 0.0
    %176 = vmatprep.subr.mxu0 0.0
    %177 = vmatpush1.xpose.msra.mxu0 0.0
    %178 = vmatprep.mubr.f32.mxu0 0.0
    %179 = vmatmul.mubr.f32.gmra.mrb[0].mxu0 %v58
    %v180 = vpop.f32.mrb[0].mxu0
    %v181 = vadd.f32 %v40, %v180
    %v182 = vpop.f32.mrb[0].mxu0
    %183 = vmatprep.mubr.f32.mxu0 0.0
    %184 = vmatmul.mubr.f32.gmra.mrb[0].mxu0 %v60
    %v185 = vpop.f32.mrb[0].mxu0
    %v186 = vadd.f32 %v45, %v185
    %v187 = vpop.f32.mrb[0].mxu0
    %188 = vmatprep.mubr.f32.mxu0 0.0
    %189 = vmatmul.mubr.f32.gmra.mrb[0].mxu0 %v62
    %v190 = vpop.f32.mrb[0].mxu0
    %v191 = vadd.f32 %v50, %v190
    %v192 = vpop.f32.mrb[0].mxu0
    %193 = vmatprep.mubr.f32.mxu0 0.0
    %194 = vmatmul.mubr.f32.gmra.mrb[0].mxu0 %v64
    %v195 = vpop.f32.mrb[0].mxu0
    %v196 = vadd.f32 %v55, %v195
    %v197 = vpop.f32.mrb[0].mxu0
    %198 = vdwg.mxu0
    %v199 = vmax.f32 %v181, 0.0
    %v200 = vmax.f32 %v186, 0.0
    %v201 = vmax.f32 %v191, 0.0
    %v202 = vmax.f32 %v196, 0.0
    %204 = vset.pattern.permute.xlu0 32
    %205 = vperm.xlu0 %204, %v16
    %v206 = vpop.permute.xlu0 %205
    %209 = vset.pattern.permute.xlu0 32
    %210 = vperm.xlu0 %209, %v17
    %v211 = vpop.permute.xlu0 %210
    %214 = vset.pattern.permute.xlu0 32
    %215 = vperm.xlu0 %214, %v18
    %v216 = vpop.permute.xlu0 %215
    %219 = vset.pattern.permute.xlu0 32
    %220 = vperm.xlu0 %219, %v19
    %v221 = vpop.permute.xlu0 %220
    %vm223 = vcmask 261120
    %v224 = vsel %vm223, %v16, 0
    %v226 = vsel %vm223, %v17, 0
    %v228 = vsel %vm223, %v18, 0
    %v230 = vsel %vm223, %v19, 0
    %232 = vmatprep.subr.mxu0 0.0
    %233 = vmatpush1.msra.mxu0 %v199
    %234 = vmatprep.subr.mxu0 0.0
    %235 = vmatpush1.msra.mxu0 %v200
    %236 = vmatprep.subr.mxu0 0.0
    %237 = vmatpush1.msra.mxu0 %v201
    %238 = vmatprep.subr.mxu0 0.0
    %239 = vmatpush1.msra.mxu0 %v202
    %240 = vmatprep.subr.mxu0 0.0
    %241 = vmatpush1.msra.mxu0 0.0
    %242 = vmatprep.subr.mxu0 0.0
    %243 = vmatpush1.msra.mxu0 0.0
    %244 = vmatprep.subr.mxu0 0.0
    %245 = vmatpush1.msra.mxu0 0.0
    %246 = vmatprep.subr.mxu0 0.0
    %247 = vmatpush1.msra.mxu0 0.0
    %248 = vmatprep.subr.mxu0 0.0
    %249 = vmatpush1.msra.mxu0 0.0
    %250 = vmatprep.subr.mxu0 0.0
    %251 = vmatpush1.msra.mxu0 0.0
    %252 = vmatprep.subr.mxu0 0.0
    %253 = vmatpush1.msra.mxu0 0.0
    %254 = vmatprep.subr.mxu0 0.0
    %255 = vmatpush1.msra.mxu0 0.0
    %256 = vmatprep.subr.mxu0 0.0
    %257 = vmatpush1.msra.mxu0 0.0
    %258 = vmatprep.subr.mxu0 0.0
    %259 = vmatpush1.msra.mxu0 0.0
    %260 = vmatprep.subr.mxu0 0.0
    %261 = vmatpush1.msra.mxu0 0.0
    %262 = vmatprep.subr.mxu0 0.0
    %263 = vmatpush1.msra.mxu0 0.0
    %264 = vmatprep.subr.mxu0 0.0
    %265 = vmatpush1.msra.mxu0 0.0
    %266 = vmatprep.subr.mxu0 0.0
    %267 = vmatpush1.msra.mxu0 0.0
    %268 = vmatprep.subr.mxu0 0.0
    %269 = vmatpush1.msra.mxu0 0.0
    %270 = vmatprep.subr.mxu0 0.0
    %271 = vmatpush1.msra.mxu0 0.0
    %272 = vmatprep.subr.mxu0 0.0
    %273 = vmatpush1.msra.mxu0 0.0
    %274 = vmatprep.subr.mxu0 0.0
    %275 = vmatpush1.msra.mxu0 0.0
    %276 = vmatprep.subr.mxu0 0.0
    %277 = vmatpush1.msra.mxu0 0.0
    %278 = vmatprep.subr.mxu0 0.0
    %279 = vmatpush1.msra.mxu0 0.0
    %280 = vmatprep.subr.mxu0 0.0
    %281 = vmatpush1.msra.mxu0 0.0
    %282 = vmatprep.subr.mxu0 0.0
    %283 = vmatpush1.msra.mxu0 0.0
    %284 = vmatprep.subr.mxu0 0.0
    %285 = vmatpush1.msra.mxu0 0.0
    %286 = vmatprep.subr.mxu0 0.0
    %287 = vmatpush1.msra.mxu0 0.0
    %288 = vmatprep.subr.mxu0 0.0
    %289 = vmatpush1.msra.mxu0 0.0
    %290 = vmatprep.subr.mxu0 0.0
    %291 = vmatpush1.msra.mxu0 0.0
    %292 = vmatprep.subr.mxu0 0.0
    %293 = vmatpush1.msra.mxu0 0.0
    %294 = vmatprep.subr.mxu0 0.0
    %295 = vmatpush1.msra.mxu0 0.0
    %296 = vmatprep.mubr.f32.mxu0 0.0
    %297 = vmatmul.mubr.f32.gmra.mrb[0].mxu0 %v224
    %v298 = vpop.f32.mrb[0].mxu0
    %v299 = vadd.f32 %v206, %v298
    %v300 = vpop.f32.mrb[0].mxu0
    %301 = vmatprep.mubr.f32.mxu0 0.0
    %302 = vmatmul.mubr.f32.gmra.mrb[0].mxu0 %v226
    %v303 = vpop.f32.mrb[0].mxu0
    %v304 = vadd.f32 %v211, %v303
    %v305 = vpop.f32.mrb[0].mxu0
    %306 = vmatprep.mubr.f32.mxu0 0.0
    %307 = vmatmul.mubr.f32.gmra.mrb[0].mxu0 %v228
    %v308 = vpop.f32.mrb[0].mxu0
    %v309 = vadd.f32 %v216, %v308
    %v310 = vpop.f32.mrb[0].mxu0
    %311 = vmatprep.mubr.f32.mxu0 0.0
    %312 = vmatmul.mubr.f32.gmra.mrb[0].mxu0 %v230
    %v313 = vpop.f32.mrb[0].mxu0
    %v314 = vadd.f32 %v221, %v313
    %v315 = vpop.f32.mrb[0].mxu0
    %316 = vdwg.mxu0
    %v317 = vmax.f32 %v299, 0.0
    %v318 = vmax.f32 %v304, 0.0
    %v319 = vmax.f32 %v309, 0.0
    %v320 = vmax.f32 %v314, 0.0
    %322 = vset.pattern.permute.xlu0 32
    %323 = vperm.xlu0 %322, %v20
    %v324 = vpop.permute.xlu0 %323
    %v326 = vsel %vm223, %v20, 0
    %328 = vmatprep.subr.mxu0 0.0
    %329 = vmatpush1.msra.mxu0 %v317
    %330 = vmatprep.subr.mxu0 0.0
    %331 = vmatpush1.msra.mxu0 %v318
    %332 = vmatprep.subr.mxu0 0.0
    %333 = vmatpush1.msra.mxu0 %v319
    %334 = vmatprep.subr.mxu0 0.0
    %335 = vmatpush1.msra.mxu0 %v320
    %336 = vmatprep.subr.mxu0 0.0
    %337 = vmatpush1.msra.mxu0 0.0
    %338 = vmatprep.subr.mxu0 0.0
    %339 = vmatpush1.msra.mxu0 0.0
    %340 = vmatprep.subr.mxu0 0.0
    %341 = vmatpush1.msra.mxu0 0.0
    %342 = vmatprep.subr.mxu0 0.0
    %343 = vmatpush1.msra.mxu0 0.0
    %344 = vmatprep.subr.mxu0 0.0
    %345 = vmatpush1.msra.mxu0 0.0
    %346 = vmatprep.subr.mxu0 0.0
    %347 = vmatpush1.msra.mxu0 0.0
    %348 = vmatprep.subr.mxu0 0.0
    %349 = vmatpush1.msra.mxu0 0.0
    %350 = vmatprep.subr.mxu0 0.0
    %351 = vmatpush1.msra.mxu0 0.0
    %352 = vmatprep.subr.mxu0 0.0
    %353 = vmatpush1.msra.mxu0 0.0
    %354 = vmatprep.subr.mxu0 0.0
    %355 = vmatpush1.msra.mxu0 0.0
    %356 = vmatprep.subr.mxu0 0.0
    %357 = vmatpush1.msra.mxu0 0.0
    %358 = vmatprep.subr.mxu0 0.0
    %359 = vmatpush1.msra.mxu0 0.0
    %360 = vmatprep.subr.mxu0 0.0
    %361 = vmatpush1.msra.mxu0 0.0
    %362 = vmatprep.subr.mxu0 0.0
    %363 = vmatpush1.msra.mxu0 0.0
    %364 = vmatprep.subr.mxu0 0.0
    %365 = vmatpush1.msra.mxu0 0.0
    %366 = vmatprep.subr.mxu0 0.0
    %367 = vmatpush1.msra.mxu0 0.0
    %368 = vmatprep.subr.mxu0 0.0
    %369 = vmatpush1.msra.mxu0 0.0
    %370 = vmatprep.subr.mxu0 0.0
    %371 = vmatpush1.msra.mxu0 0.0
    %372 = vmatprep.subr.mxu0 0.0
    %373 = vmatpush1.msra.mxu0 0.0
    %374 = vmatprep.subr.mxu0 0.0
    %375 = vmatpush1.msra.mxu0 0.0
    %376 = vmatprep.subr.mxu0 0.0
    %377 = vmatpush1.msra.mxu0 0.0
    %378 = vmatprep.subr.mxu0 0.0
    %379 = vmatpush1.msra.mxu0 0.0
    %380 = vmatprep.subr.mxu0 0.0
    %381 = vmatpush1.msra.mxu0 0.0
    %382 = vmatprep.subr.mxu0 0.0
    %383 = vmatpush1.msra.mxu0 0.0
    %384 = vmatprep.subr.mxu0 0.0
    %385 = vmatpush1.msra.mxu0 0.0
    %386 = vmatprep.subr.mxu0 0.0
    %387 = vmatpush1.msra.mxu0 0.0
    %388 = vmatprep.subr.mxu0 0.0
    %389 = vmatpush1.msra.mxu0 0.0
    %390 = vmatprep.subr.mxu0 0.0
    %391 = vmatpush1.msra.mxu0 0.0
    %392 = vmatprep.mubr.f32.mxu0 0.0
    %393 = vmatmul.mubr.f32.gmra.mrb[0].mxu0 %v326
    %v394 = vpop.f32.mrb[0].mxu0
    %v395 = vadd.f32 %v324, %v394
    %v396 = vpop.f32.mrb[0].mxu0
    %397 = vdwg.mxu0
    %398 = vst [vmem:[#allocation2] sm:$0x3] %v395
    // Predicated region
    $region10: #{tpu_custom_call.1} parent=1 // pred_check
      _
    $region11: #{tpu_custom_call.1} parent=1 // pred_check_branch
      %400 = sbr.rel (0) target = $region13
    $region12: #{tpu_custom_call.1} parent=1 // pred_region
      %s402 = ssub.s32 32, 32
      %403 = vsyncadd [#allocation3], %s402
      %s405 = sshll.u32 [#allocation2], 4
      %s406 = int_to_ptr.vmem [resolvable:$true] %s405
      %408 = dma.vmem_to_hbm [thread:$0]  %s406, 32, %s2, [#allocation3]
    $region13: #{tpu_custom_call.1} parent=1 // pred_fallthru
      _
    // Predicated region
    $region14: #{tpu_custom_call.1} parent=1 // pred_check
      _
    $region15: #{tpu_custom_call.1} parent=1 // pred_check_branch
      %410 = sbr.rel (0) target = $region17
    $region16: #{tpu_custom_call.1} parent=1 // pred_region
      %411 = dma.done [#allocation3], 32
    $region17: #{tpu_custom_call.1} parent=1 // pred_fallthru
      _
    %412 = vsyncpa [#allocation3], 1

</llo_original>
